<compile_context>
chip_gen: v5e
topology: v5e:2x2
jax: 0.10.0
libtpu: 0.0.40
codegen_flags: <defaults>
</compile_context>

<pallas_src>
import functools

import numpy as np
import jax
import jax.numpy as jnp
from jax.experimental import pallas as pl
from jax.experimental.pallas import tpu as pltpu

# Padded-query sentinel coordinate -> L1 cost ~2e18, never selected while
# num_queries >= match_times (which we require, mirroring torch.topk).
_PAD_COORD = 1e18


def _round_up(x, m):
    return ((x + m - 1) // m) * m


def _cdiv(a, b):
    return (a + b - 1) // b


def _make_kernel(match_times: int, n_chunks: int, chunk: int):
    K = match_times

    def kernel(src_ref, tgt_ref, out_ref, topv_ref, topi_ref):
        # src_ref : (4, BLOCK)    xyxy query boxes (one image, one source), transposed
        # tgt_ref : (G_cmp, 4)    xyxy gt boxes, zero-padded to an 8-multiple bucket
        # out_ref : (G_cmp, LANE) int32; lanes [0, K) hold the top-K query ids per gt
        # topv_ref/topi_ref : (G_cmp, K) running top-K cost / global query index
        kblk = pl.program_id(2)
        n_blk = pl.num_programs(2)
        g_cmp = tgt_ref.shape[0]
        block = src_ref.shape[1]
        lane_out = out_ref.shape[1]

        @pl.when(kblk == 0)
        def _():
            topv_ref[...] = jnp.full(topv_ref.shape, jnp.inf, topv_ref.dtype)
            topi_ref[...] = jnp.full(topi_ref.shape, -1, topi_ref.dtype)

        # Hoisted target cxcywh columns, (G_cmp, 1) each.
        tx0 = tgt_ref[:, 0:1]
        ty0 = tgt_ref[:, 1:2]
        tx1 = tgt_ref[:, 2:3]
        ty1 = tgt_ref[:, 3:4]
        tcx = (tx0 + tx1) * 0.5
        tcy = (ty0 + ty1) * 0.5
        tw = tx1 - tx0
        th = ty1 - ty0

        big = jnp.int32(2 ** 30)
        inf = jnp.float32(jnp.inf)
        # Hoisted iotas (JAX does not CSE broadcasts).
        lane_c = jax.lax.broadcasted_iota(jnp.int32, (g_cmp, chunk), 1)
        lane_k = jax.lax.broadcasted_iota(jnp.int32, (g_cmp, K), 1)

        rv = topv_ref[...]          # (G_cmp, K) running top-K values
        ri = topi_ref[...]          # (G_cmp, K) running top-K global query indices
        base_blk = kblk * block

        picks = []
        for c in range(n_chunks):
            # Static slices of the already-VMEM-resident big block: the DMA block is
            # large (amortizes per-grid-step overhead), the compute chunk is small
            # enough that cv/ci stay register-resident during the K-merge.
            lo, hi = c * chunk, (c + 1) * chunk
            sx0 = src_ref[0:1, lo:hi]
            sy0 = src_ref[1:2, lo:hi]
            sx1 = src_ref[2:3, lo:hi]
            sy1 = src_ref[3:4, lo:hi]
            # Query cxcywh stays narrow at (1, chunk); only the final |a-b| terms
            # broadcast to (G_cmp, chunk).
            scx = (sx0 + sx1) * 0.5
            scy = (sy0 + sy1) * 0.5
            sw = sx1 - sx0
            sh = sy1 - sy0
            cv = (jnp.abs(scx - tcx) + jnp.abs(scy - tcy)
                  + jnp.abs(sw - tw) + jnp.abs(sh - th))      # (G_cmp, chunk) f32
            ci = lane_c + (base_blk + lo)                     # global query ids
            # Padded query lanes carry _PAD_COORD coords (set in the jit'd prep), so
            # their cost is huge-but-finite: no per-lane validity mask needed here.

            # Merge running top-K with this chunk: K iterative masked argmins over
            # the union {running} U {chunk}.  Ties break to the smallest global
            # index; running indices are always < this chunk's, so the result
            # matches a stable argsort over the full query axis.
            picks = []
            nv = rv
            ni = ri
            for t in range(K):
                m = jnp.minimum(jnp.min(rv, axis=1, keepdims=True),
                                jnp.min(cv, axis=1, keepdims=True))               # (G,1)
                pick = jnp.minimum(
                    jnp.min(jnp.where(rv == m, ri, big), axis=1, keepdims=True),
                    jnp.min(jnp.where(cv == m, ci, big), axis=1, keepdims=True))   # (G,1)
                picks.append(pick)
                nv = jnp.where(lane_k == t, m, nv)
                ni = jnp.where(lane_k == t, pick, ni)
                rv = jnp.where(ri == pick, inf, rv)
                cv = jnp.where(ci == pick, inf, cv)
            rv = nv
            ri = ni

        # One batched scratch writeback per grid step (not 2K narrow column stores).
        topv_ref[...] = rv
        topi_ref[...] = ri

        # On the last query block, emit the lane-dense (G_cmp, lane_out) index block:
        # gt rows on sublanes, top-K ids on the first K lanes.  No XLU relayout.
        @pl.when(kblk == n_blk - 1)
        def _():
            out = jnp.zeros((g_cmp, lane_out), jnp.int32)
            lane = jax.lax.broadcasted_iota(jnp.int32, (g_cmp, lane_out), 1)
            for t in range(K):
                out = jnp.where(lane == t, picks[t], out)
            out_ref[...] = out

    return kernel


@functools.lru_cache(maxsize=None)
def _build_matcher(bs, num_queries, n_pad, block, chunk, g_cmp, lane_out,
                   match_times):
    n_blocks = n_pad // block
    n_chunks = block // chunk
    kernel = _make_kernel(match_times, n_chunks, chunk)
    matcher = pl.pallas_call(
        kernel,
        out_shape=jax.ShapeDtypeStruct((bs, 2, g_cmp, lane_out), jnp.int32),
        grid_spec=pltpu.PrefetchScalarGridSpec(
            num_scalar_prefetch=0,
            grid=(bs, 2, n_blocks),                 # (image, pred/anchor, query block)
            in_specs=[
                # stacked boxes: (bs, 2, 4, n_pad) -> one (4, block) slab per step
                pl.BlockSpec((None, None, 4, block), lambda b, s, k: (b, s, 0, k)),
                # targets: (bs, g_cmp, 4), constant across source & query blocks
                pl.BlockSpec((None, g_cmp, 4), lambda b, s, k: (b, 0, 0)),
            ],
            out_specs=pl.BlockSpec((None, None, g_cmp, lane_out),
                                   lambda b, s, k: (b, s, 0, 0)),
            scratch_shapes=[pltpu.VMEM((g_cmp, match_times), jnp.float32),
                            pltpu.VMEM((g_cmp, match_times), jnp.int32)],
        ),
        compiler_params=pltpu.CompilerParams(
            dimension_semantics=("parallel", "parallel", "arbitrary")),
    )

    pad_n = n_pad - num_queries

    def fwd(pred, anc, tgt):
        # Prep fused into the same jit as the pallas_call: one XLA pass instead of
        # several eager stack/transpose/pad HBM round trips.
        boxes = jnp.stack([pred.astype(jnp.float32), anc.astype(jnp.float32)],
                          axis=1)                           # (bs, 2, N, 4)
        boxes = jnp.transpose(boxes, (0, 1, 3, 2))          # (bs, 2, 4, N)
        if pad_n:
            boxes = jnp.pad(boxes, ((0, 0), (0, 0), (0, 0), (0, pad_n)),
                            constant_values=_PAD_COORD)
        return matcher(boxes, tgt)

    return jax.jit(fwd)


def validness_match_forward(pred_boxes, anchors, targets, match_times=4,
                            block_n=8192, chunk_n=1024):
    """JAX/Pallas equivalent of validness_match.forward.

    pred_boxes, anchors: (bs, num_queries, 4) xyxy.
    targets: list (len bs) of (n_i, 4) xyxy gt boxes (== v.gt_boxes.tensor).
    block_n: query lanes per grid step (DMA block; amortizes pipeline overhead).
    chunk_n: query lanes per in-kernel compute chunk; 1024 is v5e-safe,
             2048 works well on v6e/v7x.
    Returns a list of (idx_i, idx_j) index-array tuples, one per batch element.
    """
    pred = jnp.asarray(pred_boxes, jnp.float32)
    anc = jnp.asarray(anchors, jnp.float32)
    bs, num_queries = pred.shape[:2]
    if num_queries < match_times:
        # torch.topk(k > n) would raise; mirror that instead of emitting sentinels.
        raise ValueError("num_queries must be >= match_times")
    sizes = [int(np.asarray(t).shape[0]) for t in targets]

    # Shape buckets: gt rows to a multiple of 8 (sublanes), output lanes to 128.
    g_cmp = max(8, _round_up(max(sizes) if sizes else 1, 8))
    lane_out = max(128, _round_up(match_times, 128))

    # Compute-chunk size: keep the (g_cmp, chunk) cost/index pair ~vreg-resident.
    chunk_cap = max(128, ((16 * 1024) // g_cmp) // 128 * 128)
    chunk = max(128, min(_round_up(chunk_n, 128), chunk_cap,
                         _round_up(num_queries, 128)))
    n_chunks_total = _cdiv(num_queries, chunk)
    cpb = max(1, min(block_n // chunk, n_chunks_total))
    n_blocks = _cdiv(n_chunks_total, cpb)
    cpb = _cdiv(n_chunks_total, n_blocks)       # rebalance: <1 chunk of padding waste
    block = cpb * chunk
    n_pad = n_blocks * block

    tgt_np = np.zeros((bs, g_cmp, 4), np.float32)
    for b in range(bs):
        if sizes[b] > 0:
            tgt_np[b, :sizes[b]] = np.asarray(targets[b], np.float32)

    matcher = _build_matcher(bs, num_queries, n_pad, block, chunk, g_cmp,
                             lane_out, match_times)
    out = matcher(pred, anc, jnp.asarray(tgt_np))   # (bs, 2, g_cmp, lane_out) int32
    out_np = np.asarray(jax.device_get(out))        # single host round trip per call

    K = match_times
    all_indices = []
    for b in range(bs):
        n_gt = sizes[b]
        ip = out_np[b, 0, :n_gt, :K].T              # (K, n_gt) pred top-K query ids
        ia = out_np[b, 1, :n_gt, :K].T              # (K, n_gt) anchor top-K query ids
        all_idx_i = np.concatenate([ip, ia], axis=1).reshape(-1)
        all_idx_j = np.tile(np.arange(n_gt), 2 * K)
        # TODO(synk): torch returns int64; JAX default x64 is off, so indices are
        # int32 (values identical).
        all_indices.append((jnp.asarray(all_idx_i, dtype=jnp.int32),
                            jnp.asarray(all_idx_j, dtype=jnp.int32)))
    return all_indices


# ----------------------- pure numpy reference -----------------------

def _cxcywh_np(x):
    x0, y0, x1, y1 = x[..., 0], x[..., 1], x[..., 2], x[..., 3]
    return np.stack([(x0 + x1) / 2, (y0 + y1) / 2, x1 - x0, y1 - y0], axis=-1)


def reference_forward(pred_boxes, anchors, targets, match_times=4):
    bs = pred_boxes.shape[0]
    out = []
    for b in range(bs):
        tgt_c = _cxcywh_np(np.asarray(targets[b], dtype=np.float32))
        n = tgt_c.shape[0]

        def topk_idx(src):
            src_c = _cxcywh_np(np.asarray(src, dtype=np.float32))
            cost = np.abs(src_c[:, None, :] - tgt_c[None, :, :]).sum(-1)  # (N, G)
            order = np.argsort(cost, axis=0, kind="stable")
            return order[:match_times]                                    # (K, G)

        ip = topk_idx(pred_boxes[b])
        ia = topk_idx(anchors[b])
        rows_i = [np.concatenate([ip[t], ia[t]]) for t in range(match_times)]
        rows_j = [np.concatenate([np.arange(n), np.arange(n)])
                  for _ in range(match_times)]
        out.append((np.hstack(rows_i), np.hstack(rows_j)))
    return out


if __name__ == "__main__":
    key = jax.random.PRNGKey(0)
    k_pred, k_anc, k_tgt = jax.random.split(key, 3)

    bs, num_queries, match_times = 2, 200, 4
    sizes = [5, 7]  # gt boxes per image

    def make_boxes(k, lead_shape):
        kxy, kwh = jax.random.split(k)
        xy = jax.random.uniform(kxy, lead_shape + (2,), minval=0.0, maxval=0.8)
        wh = jax.random.uniform(kwh, lead_shape + (2,), minval=0.05, maxval=0.2)
        return jnp.concatenate([xy, xy + wh], axis=-1).astype(jnp.float32)

    pred_boxes = make_boxes(k_pred, (bs, num_queries))
    anchors = make_boxes(k_anc, (bs, num_queries))
    targets = [make_boxes(kk, (s,))
               for kk, s in zip(jax.random.split(k_tgt, bs), sizes)]

    ref = reference_forward(np.asarray(pred_boxes), np.asarray(anchors),
                            [np.asarray(t) for t in targets], match_times)

    # Exercise: default (single block/chunk), multi-chunk within one block (with
    # padded lanes in the tail chunk), and multi-block running-merge paths.
    for kwargs in ({}, {"block_n": 256, "chunk_n": 128},
                   {"block_n": 128, "chunk_n": 128}):
        out = validness_match_forward(pred_boxes, anchors, targets, match_times,
                                      **kwargs)
        jax.block_until_ready(out)
        for (oi, oj), (ri_, rj_) in zip(out, ref):
            assert np.array_equal(np.asarray(oi), ri_), f"idx_i mismatch {kwargs}"
            assert np.array_equal(np.asarray(oj), rj_), f"idx_j mismatch {kwargs}"

    print("KERNEL_OK")
</pallas_src>

<mosaic_0001>
module attributes {stable_mosaic.version = 11 : i64} {
  func.func @kernel(%arg0: i32, %arg1: i32, %arg2: i32, %arg3: memref<1x1x4x256xf32, #tpu.memory_space<vmem>>, %arg4: memref<1x8x4xf32, #tpu.memory_space<vmem>>, %arg5: memref<1x1x8x128xi32, #tpu.memory_space<vmem>>, %arg6: memref<8x4xf32, #tpu.memory_space<vmem>>, %arg7: memref<8x4xi32, #tpu.memory_space<vmem>>) attributes {dimension_semantics = [#tpu.dimension_semantics<parallel>, #tpu.dimension_semantics<parallel>, #tpu.dimension_semantics<arbitrary>], iteration_bounds = array<i64: 2, 2, 1>, scalar_prefetch = 0 : i64, scratch_operands = 2 : i64, tpu.core_type = #tpu.core_type<tc>, window_params = [{transform_indices = @transform_0, window_bounds = array<i64: 1, 1, 4, 256>}, {transform_indices = @transform_1, window_bounds = array<i64: 1, 8, 4>}, {transform_indices = @transform_2, window_bounds = array<i64: 1, 1, 8, 128>}]} {
    %c0_i32 = arith.constant 0 : i32
    %0 = arith.cmpi eq, %arg2, %c0_i32 : i32
    %1 = arith.extui %0 : i1 to i32
    %c0_i32_0 = arith.constant 0 : i32
    %2 = arith.cmpi ne, %1, %c0_i32_0 : i32
    scf.if %2 {
      %cst_73 = arith.constant 0x7F800000 : f32
      %203 = vector.broadcast %cst_73 : f32 to vector<8x4xf32>
      %c0_74 = arith.constant 0 : index
      %c0_75 = arith.constant 0 : index
      %204 = vector.load %arg6[%c0_74, %c0_75] : memref<8x4xf32, #tpu.memory_space<vmem>>, vector<8x4xf32>
      tpu.vector_store %arg6[%c0_74, %c0_75], %203 {strides = array<i32>} : memref<8x4xf32, #tpu.memory_space<vmem>>, vector<8x4xf32>,
      %c-1_i32 = arith.constant -1 : i32
      %205 = vector.broadcast %c-1_i32 : i32 to vector<8x4xi32>
      %c0_76 = arith.constant 0 : index
      %c0_77 = arith.constant 0 : index
      %206 = vector.load %arg7[%c0_76, %c0_77] : memref<8x4xi32, #tpu.memory_space<vmem>>, vector<8x4xi32>
      tpu.vector_store %arg7[%c0_76, %c0_77], %205 {strides = array<i32>} : memref<8x4xi32, #tpu.memory_space<vmem>>, vector<8x4xi32>,
    } else {
    }
    %c0 = arith.constant 0 : index
    %c0_1 = arith.constant 0 : index
    %c0_2 = arith.constant 0 : index
    %3 = vector.load %arg4[%c0, %c0_1, %c0_2] : memref<1x8x4xf32, #tpu.memory_space<vmem>>, vector<1x8x1xf32>
    %4 = vector.shape_cast %3 : vector<1x8x1xf32> to vector<8x1xf32>
    %c0_3 = arith.constant 0 : index
    %c0_4 = arith.constant 0 : index
    %c1 = arith.constant 1 : index
    %5 = vector.load %arg4[%c0_3, %c0_4, %c1] : memref<1x8x4xf32, #tpu.memory_space<vmem>>, vector<1x8x1xf32>
    %6 = vector.shape_cast %5 : vector<1x8x1xf32> to vector<8x1xf32>
    %c0_5 = arith.constant 0 : index
    %c0_6 = arith.constant 0 : index
    %c2 = arith.constant 2 : index
    %7 = vector.load %arg4[%c0_5, %c0_6, %c2] : memref<1x8x4xf32, #tpu.memory_space<vmem>>, vector<1x8x1xf32>
    %8 = vector.shape_cast %7 : vector<1x8x1xf32> to vector<8x1xf32>
    %c0_7 = arith.constant 0 : index
    %c0_8 = arith.constant 0 : index
    %c3 = arith.constant 3 : index
    %9 = vector.load %arg4[%c0_7, %c0_8, %c3] : memref<1x8x4xf32, #tpu.memory_space<vmem>>, vector<1x8x1xf32>
    %10 = vector.shape_cast %9 : vector<1x8x1xf32> to vector<8x1xf32>
    %11 = arith.addf %4, %8 : vector<8x1xf32>
    %cst = arith.constant 5.000000e-01 : f32
    %12 = vector.broadcast %cst : f32 to vector<8x1xf32>
    %13 = arith.mulf %11, %12 : vector<8x1xf32>
    %14 = arith.addf %6, %10 : vector<8x1xf32>
    %cst_9 = arith.constant 5.000000e-01 : f32
    %15 = vector.broadcast %cst_9 : f32 to vector<8x1xf32>
    %16 = arith.mulf %14, %15 : vector<8x1xf32>
    %17 = arith.subf %8, %4 : vector<8x1xf32>
    %18 = arith.subf %10, %6 : vector<8x1xf32>
    %19 = tpu.iota {dimensions = array<i32: 1>} : vector<8x256xi32>
    %20 = tpu.iota {dimensions = array<i32: 1>} : vector<8x4xi32>
    %c0_10 = arith.constant 0 : index
    %c0_11 = arith.constant 0 : index
    %21 = vector.load %arg6[%c0_10, %c0_11] : memref<8x4xf32, #tpu.memory_space<vmem>>, vector<8x4xf32>
    %c0_12 = arith.constant 0 : index
    %c0_13 = arith.constant 0 : index
    %22 = vector.load %arg7[%c0_12, %c0_13] : memref<8x4xi32, #tpu.memory_space<vmem>>, vector<8x4xi32>
    %c256_i32 = arith.constant 256 : i32
    %23 = arith.muli %arg2, %c256_i32 : i32
    %c0_14 = arith.constant 0 : index
    %c0_15 = arith.constant 0 : index
    %c0_16 = arith.constant 0 : index
    %c0_17 = arith.constant 0 : index
    %24 = vector.load %arg3[%c0_14, %c0_15, %c0_16, %c0_17] : memref<1x1x4x256xf32, #tpu.memory_space<vmem>>, vector<1x1x1x256xf32>
    %25 = vector.shape_cast %24 : vector<1x1x1x256xf32> to vector<1x256xf32>
    %c0_18 = arith.constant 0 : index
    %c0_19 = arith.constant 0 : index
    %c1_20 = arith.constant 1 : index
    %c0_21 = arith.constant 0 : index
    %26 = vector.load %arg3[%c0_18, %c0_19, %c1_20, %c0_21] : memref<1x1x4x256xf32, #tpu.memory_space<vmem>>, vector<1x1x1x256xf32>
    %27 = vector.shape_cast %26 : vector<1x1x1x256xf32> to vector<1x256xf32>
    %c0_22 = arith.constant 0 : index
    %c0_23 = arith.constant 0 : index
    %c2_24 = arith.constant 2 : index
    %c0_25 = arith.constant 0 : index
    %28 = vector.load %arg3[%c0_22, %c0_23, %c2_24, %c0_25] : memref<1x1x4x256xf32, #tpu.memory_space<vmem>>, vector<1x1x1x256xf32>
    %29 = vector.shape_cast %28 : vector<1x1x1x256xf32> to vector<1x256xf32>
    %c0_26 = arith.constant 0 : index
    %c0_27 = arith.constant 0 : index
    %c3_28 = arith.constant 3 : index
    %c0_29 = arith.constant 0 : index
    %30 = vector.load %arg3[%c0_26, %c0_27, %c3_28, %c0_29] : memref<1x1x4x256xf32, #tpu.memory_space<vmem>>, vector<1x1x1x256xf32>
    %31 = vector.shape_cast %30 : vector<1x1x1x256xf32> to vector<1x256xf32>
    %32 = arith.addf %25, %29 : vector<1x256xf32>
    %cst_30 = arith.constant 5.000000e-01 : f32
    %33 = vector.broadcast %cst_30 : f32 to vector<1x256xf32>
    %34 = arith.mulf %32, %33 : vector<1x256xf32>
    %35 = arith.addf %27, %31 : vector<1x256xf32>
    %cst_31 = arith.constant 5.000000e-01 : f32
    %36 = vector.broadcast %cst_31 : f32 to vector<1x256xf32>
    %37 = arith.mulf %35, %36 : vector<1x256xf32>
    %38 = arith.subf %29, %25 : vector<1x256xf32>
    %39 = arith.subf %31, %27 : vector<1x256xf32>
    %40 = vector.broadcast %34 : vector<1x256xf32> to vector<8x256xf32>
    %41 = vector.broadcast %13 : vector<8x1xf32> to vector<8x256xf32>
    %42 = arith.subf %40, %41 : vector<8x256xf32>
    %43 = math.absf %42 : vector<8x256xf32>
    %44 = vector.broadcast %37 : vector<1x256xf32> to vector<8x256xf32>
    %45 = vector.broadcast %16 : vector<8x1xf32> to vector<8x256xf32>
    %46 = arith.subf %44, %45 : vector<8x256xf32>
    %47 = math.absf %46 : vector<8x256xf32>
    %48 = arith.addf %43, %47 : vector<8x256xf32>
    %49 = vector.broadcast %38 : vector<1x256xf32> to vector<8x256xf32>
    %50 = vector.broadcast %17 : vector<8x1xf32> to vector<8x256xf32>
    %51 = arith.subf %49, %50 : vector<8x256xf32>
    %52 = math.absf %51 : vector<8x256xf32>
    %53 = arith.addf %48, %52 : vector<8x256xf32>
    %54 = vector.broadcast %39 : vector<1x256xf32> to vector<8x256xf32>
    %55 = vector.broadcast %18 : vector<8x1xf32> to vector<8x256xf32>
    %56 = arith.subf %54, %55 : vector<8x256xf32>
    %57 = math.absf %56 : vector<8x256xf32>
    %58 = arith.addf %53, %57 : vector<8x256xf32>
    %c0_i32_32 = arith.constant 0 : i32
    %59 = arith.addi %23, %c0_i32_32 : i32
    %60 = vector.broadcast %59 : i32 to vector<8x256xi32>
    %61 = arith.addi %19, %60 : vector<8x256xi32>
    %cst_33 = arith.constant dense<0x7F800000> : vector<8xf32>
    %62 = vector.multi_reduction <minimumf>, %21, %cst_33 [1] : vector<8x4xf32> to vector<8xf32>
    %63 = vector.shape_cast %62 : vector<8xf32> to vector<8x1xf32>
    %cst_34 = arith.constant dense<0x7F800000> : vector<8xf32>
    %64 = vector.multi_reduction <minimumf>, %58, %cst_34 [1] : vector<8x256xf32> to vector<8xf32>
    %65 = vector.shape_cast %64 : vector<8xf32> to vector<8x1xf32>
    %66 = arith.minimumf %63, %65 : vector<8x1xf32>
    %67 = vector.broadcast %66 : vector<8x1xf32> to vector<8x4xf32>
    %68 = arith.cmpf oeq, %21, %67 : vector<8x4xf32>
    %c1073741824_i32 = arith.constant 1073741824 : i32
    %69 = vector.broadcast %c1073741824_i32 : i32 to vector<8x4xi32>
    %70 = arith.select %68, %22, %69 : vector<8x4xi1>, vector<8x4xi32>
    %cst_35 = arith.constant dense<2147483647> : vector<8xi32>
    %71 = vector.multi_reduction <minsi>, %70, %cst_35 [1] : vector<8x4xi32> to vector<8xi32>
    %72 = vector.shape_cast %71 : vector<8xi32> to vector<8x1xi32>
    %73 = vector.broadcast %66 : vector<8x1xf32> to vector<8x256xf32>
    %74 = arith.cmpf oeq, %58, %73 : vector<8x256xf32>
    %c1073741824_i32_36 = arith.constant 1073741824 : i32
    %75 = vector.broadcast %c1073741824_i32_36 : i32 to vector<8x256xi32>
    %76 = arith.select %74, %61, %75 : vector<8x256xi1>, vector<8x256xi32>
    %cst_37 = arith.constant dense<2147483647> : vector<8xi32>
    %77 = vector.multi_reduction <minsi>, %76, %cst_37 [1] : vector<8x256xi32> to vector<8xi32>
    %78 = vector.shape_cast %77 : vector<8xi32> to vector<8x1xi32>
    %79 = arith.minsi %72, %78 : vector<8x1xi32>
    %c0_i32_38 = arith.constant 0 : i32
    %80 = vector.broadcast %c0_i32_38 : i32 to vector<8x4xi32>
    %81 = arith.cmpi eq, %20, %80 : vector<8x4xi32>
    %82 = vector.shape_cast %66 : vector<8x1xf32> to vector<8x1xf32>
    %83 = vector.broadcast %82 : vector<8x1xf32> to vector<8x4xf32>
    %84 = arith.select %81, %83, %21 : vector<8x4xi1>, vector<8x4xf32>
    %c0_i32_39 = arith.constant 0 : i32
    %85 = vector.broadcast %c0_i32_39 : i32 to vector<8x4xi32>
    %86 = arith.cmpi eq, %20, %85 : vector<8x4xi32>
    %87 = vector.shape_cast %79 : vector<8x1xi32> to vector<8x1xi32>
    %88 = vector.broadcast %87 : vector<8x1xi32> to vector<8x4xi32>
    %89 = arith.select %86, %88, %22 : vector<8x4xi1>, vector<8x4xi32>
    %90 = vector.broadcast %79 : vector<8x1xi32> to vector<8x4xi32>
    %91 = arith.cmpi eq, %22, %90 : vector<8x4xi32>
    %cst_40 = arith.constant 0x7F800000 : f32
    %92 = vector.broadcast %cst_40 : f32 to vector<8x4xf32>
    %93 = arith.select %91, %92, %21 : vector<8x4xi1>, vector<8x4xf32>
    %94 = vector.broadcast %79 : vector<8x1xi32> to vector<8x256xi32>
    %95 = arith.cmpi eq, %61, %94 : vector<8x256xi32>
    %cst_41 = arith.constant 0x7F800000 : f32
    %96 = vector.broadcast %cst_41 : f32 to vector<8x256xf32>
    %97 = arith.select %95, %96, %58 : vector<8x256xi1>, vector<8x256xf32>
    %cst_42 = arith.constant dense<0x7F800000> : vector<8xf32>
    %98 = vector.multi_reduction <minimumf>, %93, %cst_42 [1] : vector<8x4xf32> to vector<8xf32>
    %99 = vector.shape_cast %98 : vector<8xf32> to vector<8x1xf32>
    %cst_43 = arith.constant dense<0x7F800000> : vector<8xf32>
    %100 = vector.multi_reduction <minimumf>, %97, %cst_43 [1] : vector<8x256xf32> to vector<8xf32>
    %101 = vector.shape_cast %100 : vector<8xf32> to vector<8x1xf32>
    %102 = arith.minimumf %99, %101 : vector<8x1xf32>
    %103 = vector.broadcast %102 : vector<8x1xf32> to vector<8x4xf32>
    %104 = arith.cmpf oeq, %93, %103 : vector<8x4xf32>
    %c1073741824_i32_44 = arith.constant 1073741824 : i32
    %105 = vector.broadcast %c1073741824_i32_44 : i32 to vector<8x4xi32>
    %106 = arith.select %104, %22, %105 : vector<8x4xi1>, vector<8x4xi32>
    %cst_45 = arith.constant dense<2147483647> : vector<8xi32>
    %107 = vector.multi_reduction <minsi>, %106, %cst_45 [1] : vector<8x4xi32> to vector<8xi32>
    %108 = vector.shape_cast %107 : vector<8xi32> to vector<8x1xi32>
    %109 = vector.broadcast %102 : vector<8x1xf32> to vector<8x256xf32>
    %110 = arith.cmpf oeq, %97, %109 : vector<8x256xf32>
    %c1073741824_i32_46 = arith.constant 1073741824 : i32
    %111 = vector.broadcast %c1073741824_i32_46 : i32 to vector<8x256xi32>
    %112 = arith.select %110, %61, %111 : vector<8x256xi1>, vector<8x256xi32>
    %cst_47 = arith.constant dense<2147483647> : vector<8xi32>
    %113 = vector.multi_reduction <minsi>, %112, %cst_47 [1] : vector<8x256xi32> to vector<8xi32>
    %114 = vector.shape_cast %113 : vector<8xi32> to vector<8x1xi32>
    %115 = arith.minsi %108, %114 : vector<8x1xi32>
    %c1_i32 = arith.constant 1 : i32
    %116 = vector.broadcast %c1_i32 : i32 to vector<8x4xi32>
    %117 = arith.cmpi eq, %20, %116 : vector<8x4xi32>
    %118 = vector.shape_cast %102 : vector<8x1xf32> to vector<8x1xf32>
    %119 = vector.broadcast %118 : vector<8x1xf32> to vector<8x4xf32>
    %120 = arith.select %117, %119, %84 : vector<8x4xi1>, vector<8x4xf32>
    %c1_i32_48 = arith.constant 1 : i32
    %121 = vector.broadcast %c1_i32_48 : i32 to vector<8x4xi32>
    %122 = arith.cmpi eq, %20, %121 : vector<8x4xi32>
    %123 = vector.shape_cast %115 : vector<8x1xi32> to vector<8x1xi32>
    %124 = vector.broadcast %123 : vector<8x1xi32> to vector<8x4xi32>
    %125 = arith.select %122, %124, %89 : vector<8x4xi1>, vector<8x4xi32>
    %126 = vector.broadcast %115 : vector<8x1xi32> to vector<8x4xi32>
    %127 = arith.cmpi eq, %22, %126 : vector<8x4xi32>
    %cst_49 = arith.constant 0x7F800000 : f32
    %128 = vector.broadcast %cst_49 : f32 to vector<8x4xf32>
    %129 = arith.select %127, %128, %93 : vector<8x4xi1>, vector<8x4xf32>
    %130 = vector.broadcast %115 : vector<8x1xi32> to vector<8x256xi32>
    %131 = arith.cmpi eq, %61, %130 : vector<8x256xi32>
    %cst_50 = arith.constant 0x7F800000 : f32
    %132 = vector.broadcast %cst_50 : f32 to vector<8x256xf32>
    %133 = arith.select %131, %132, %97 : vector<8x256xi1>, vector<8x256xf32>
    %cst_51 = arith.constant dense<0x7F800000> : vector<8xf32>
    %134 = vector.multi_reduction <minimumf>, %129, %cst_51 [1] : vector<8x4xf32> to vector<8xf32>
    %135 = vector.shape_cast %134 : vector<8xf32> to vector<8x1xf32>
    %cst_52 = arith.constant dense<0x7F800000> : vector<8xf32>
    %136 = vector.multi_reduction <minimumf>, %133, %cst_52 [1] : vector<8x256xf32> to vector<8xf32>
    %137 = vector.shape_cast %136 : vector<8xf32> to vector<8x1xf32>
    %138 = arith.minimumf %135, %137 : vector<8x1xf32>
    %139 = vector.broadcast %138 : vector<8x1xf32> to vector<8x4xf32>
    %140 = arith.cmpf oeq, %129, %139 : vector<8x4xf32>
    %c1073741824_i32_53 = arith.constant 1073741824 : i32
    %141 = vector.broadcast %c1073741824_i32_53 : i32 to vector<8x4xi32>
    %142 = arith.select %140, %22, %141 : vector<8x4xi1>, vector<8x4xi32>
    %cst_54 = arith.constant dense<2147483647> : vector<8xi32>
    %143 = vector.multi_reduction <minsi>, %142, %cst_54 [1] : vector<8x4xi32> to vector<8xi32>
    %144 = vector.shape_cast %143 : vector<8xi32> to vector<8x1xi32>
    %145 = vector.broadcast %138 : vector<8x1xf32> to vector<8x256xf32>
    %146 = arith.cmpf oeq, %133, %145 : vector<8x256xf32>
    %c1073741824_i32_55 = arith.constant 1073741824 : i32
    %147 = vector.broadcast %c1073741824_i32_55 : i32 to vector<8x256xi32>
    %148 = arith.select %146, %61, %147 : vector<8x256xi1>, vector<8x256xi32>
    %cst_56 = arith.constant dense<2147483647> : vector<8xi32>
    %149 = vector.multi_reduction <minsi>, %148, %cst_56 [1] : vector<8x256xi32> to vector<8xi32>
    %150 = vector.shape_cast %149 : vector<8xi32> to vector<8x1xi32>
    %151 = arith.minsi %144, %150 : vector<8x1xi32>
    %c2_i32 = arith.constant 2 : i32
    %152 = vector.broadcast %c2_i32 : i32 to vector<8x4xi32>
    %153 = arith.cmpi eq, %20, %152 : vector<8x4xi32>
    %154 = vector.shape_cast %138 : vector<8x1xf32> to vector<8x1xf32>
    %155 = vector.broadcast %154 : vector<8x1xf32> to vector<8x4xf32>
    %156 = arith.select %153, %155, %120 : vector<8x4xi1>, vector<8x4xf32>
    %c2_i32_57 = arith.constant 2 : i32
    %157 = vector.broadcast %c2_i32_57 : i32 to vector<8x4xi32>
    %158 = arith.cmpi eq, %20, %157 : vector<8x4xi32>
    %159 = vector.shape_cast %151 : vector<8x1xi32> to vector<8x1xi32>
    %160 = vector.broadcast %159 : vector<8x1xi32> to vector<8x4xi32>
    %161 = arith.select %158, %160, %125 : vector<8x4xi1>, vector<8x4xi32>
    %162 = vector.broadcast %151 : vector<8x1xi32> to vector<8x4xi32>
    %163 = arith.cmpi eq, %22, %162 : vector<8x4xi32>
    %cst_58 = arith.constant 0x7F800000 : f32
    %164 = vector.broadcast %cst_58 : f32 to vector<8x4xf32>
    %165 = arith.select %163, %164, %129 : vector<8x4xi1>, vector<8x4xf32>
    %166 = vector.broadcast %151 : vector<8x1xi32> to vector<8x256xi32>
    %167 = arith.cmpi eq, %61, %166 : vector<8x256xi32>
    %cst_59 = arith.constant 0x7F800000 : f32
    %168 = vector.broadcast %cst_59 : f32 to vector<8x256xf32>
    %169 = arith.select %167, %168, %133 : vector<8x256xi1>, vector<8x256xf32>
    %cst_60 = arith.constant dense<0x7F800000> : vector<8xf32>
    %170 = vector.multi_reduction <minimumf>, %165, %cst_60 [1] : vector<8x4xf32> to vector<8xf32>
    %171 = vector.shape_cast %170 : vector<8xf32> to vector<8x1xf32>
    %cst_61 = arith.constant dense<0x7F800000> : vector<8xf32>
    %172 = vector.multi_reduction <minimumf>, %169, %cst_61 [1] : vector<8x256xf32> to vector<8xf32>
    %173 = vector.shape_cast %172 : vector<8xf32> to vector<8x1xf32>
    %174 = arith.minimumf %171, %173 : vector<8x1xf32>
    %175 = vector.broadcast %174 : vector<8x1xf32> to vector<8x4xf32>
    %176 = arith.cmpf oeq, %165, %175 : vector<8x4xf32>
    %c1073741824_i32_62 = arith.constant 1073741824 : i32
    %177 = vector.broadcast %c1073741824_i32_62 : i32 to vector<8x4xi32>
    %178 = arith.select %176, %22, %177 : vector<8x4xi1>, vector<8x4xi32>
    %cst_63 = arith.constant dense<2147483647> : vector<8xi32>
    %179 = vector.multi_reduction <minsi>, %178, %cst_63 [1] : vector<8x4xi32> to vector<8xi32>
    %180 = vector.shape_cast %179 : vector<8xi32> to vector<8x1xi32>
    %181 = vector.broadcast %174 : vector<8x1xf32> to vector<8x256xf32>
    %182 = arith.cmpf oeq, %169, %181 : vector<8x256xf32>
    %c1073741824_i32_64 = arith.constant 1073741824 : i32
    %183 = vector.broadcast %c1073741824_i32_64 : i32 to vector<8x256xi32>
    %184 = arith.select %182, %61, %183 : vector<8x256xi1>, vector<8x256xi32>
    %cst_65 = arith.constant dense<2147483647> : vector<8xi32>
    %185 = vector.multi_reduction <minsi>, %184, %cst_65 [1] : vector<8x256xi32> to vector<8xi32>
    %186 = vector.shape_cast %185 : vector<8xi32> to vector<8x1xi32>
    %187 = arith.minsi %180, %186 : vector<8x1xi32>
    %c3_i32 = arith.constant 3 : i32
    %188 = vector.broadcast %c3_i32 : i32 to vector<8x4xi32>
    %189 = arith.cmpi eq, %20, %188 : vector<8x4xi32>
    %190 = vector.shape_cast %174 : vector<8x1xf32> to vector<8x1xf32>
    %191 = vector.broadcast %190 : vector<8x1xf32> to vector<8x4xf32>
    %192 = arith.select %189, %191, %156 : vector<8x4xi1>, vector<8x4xf32>
    %c3_i32_66 = arith.constant 3 : i32
    %193 = vector.broadcast %c3_i32_66 : i32 to vector<8x4xi32>
    %194 = arith.cmpi eq, %20, %193 : vector<8x4xi32>
    %195 = vector.shape_cast %187 : vector<8x1xi32> to vector<8x1xi32>
    %196 = vector.broadcast %195 : vector<8x1xi32> to vector<8x4xi32>
    %197 = arith.select %194, %196, %161 : vector<8x4xi1>, vector<8x4xi32>
    %c0_67 = arith.constant 0 : index
    %c0_68 = arith.constant 0 : index
    %198 = vector.load %arg6[%c0_67, %c0_68] : memref<8x4xf32, #tpu.memory_space<vmem>>, vector<8x4xf32>
    tpu.vector_store %arg6[%c0_67, %c0_68], %192 {strides = array<i32>} : memref<8x4xf32, #tpu.memory_space<vmem>>, vector<8x4xf32>,
    %c0_69 = arith.constant 0 : index
    %c0_70 = arith.constant 0 : index
    %199 = vector.load %arg7[%c0_69, %c0_70] : memref<8x4xi32, #tpu.memory_space<vmem>>, vector<8x4xi32>
    tpu.vector_store %arg7[%c0_69, %c0_70], %197 {strides = array<i32>} : memref<8x4xi32, #tpu.memory_space<vmem>>, vector<8x4xi32>,
    %c0_i32_71 = arith.constant 0 : i32
    %200 = arith.cmpi eq, %arg2, %c0_i32_71 : i32
    %201 = arith.extui %200 : i1 to i32
    %c0_i32_72 = arith.constant 0 : i32
    %202 = arith.cmpi ne, %201, %c0_i32_72 : i32
    scf.if %202 {
      %c0_i32_73 = arith.constant 0 : i32
      %203 = vector.broadcast %c0_i32_73 : i32 to vector<8x128xi32>
      %204 = tpu.iota {dimensions = array<i32: 1>} : vector<8x128xi32>
      %c0_i32_74 = arith.constant 0 : i32
      %205 = vector.broadcast %c0_i32_74 : i32 to vector<8x128xi32>
      %206 = arith.cmpi eq, %204, %205 : vector<8x128xi32>
      %207 = vector.shape_cast %79 : vector<8x1xi32> to vector<8x1xi32>
      %208 = vector.broadcast %207 : vector<8x1xi32> to vector<8x128xi32>
      %209 = arith.select %206, %208, %203 : vector<8x128xi1>, vector<8x128xi32>
      %c1_i32_75 = arith.constant 1 : i32
      %210 = vector.broadcast %c1_i32_75 : i32 to vector<8x128xi32>
      %211 = arith.cmpi eq, %204, %210 : vector<8x128xi32>
      %212 = vector.shape_cast %115 : vector<8x1xi32> to vector<8x1xi32>
      %213 = vector.broadcast %212 : vector<8x1xi32> to vector<8x128xi32>
      %214 = arith.select %211, %213, %209 : vector<8x128xi1>, vector<8x128xi32>
      %c2_i32_76 = arith.constant 2 : i32
      %215 = vector.broadcast %c2_i32_76 : i32 to vector<8x128xi32>
      %216 = arith.cmpi eq, %204, %215 : vector<8x128xi32>
      %217 = vector.shape_cast %151 : vector<8x1xi32> to vector<8x1xi32>
      %218 = vector.broadcast %217 : vector<8x1xi32> to vector<8x128xi32>
      %219 = arith.select %216, %218, %214 : vector<8x128xi1>, vector<8x128xi32>
      %c3_i32_77 = arith.constant 3 : i32
      %220 = vector.broadcast %c3_i32_77 : i32 to vector<8x128xi32>
      %221 = arith.cmpi eq, %204, %220 : vector<8x128xi32>
      %222 = vector.shape_cast %187 : vector<8x1xi32> to vector<8x1xi32>
      %223 = vector.broadcast %222 : vector<8x1xi32> to vector<8x128xi32>
      %224 = arith.select %221, %223, %219 : vector<8x128xi1>, vector<8x128xi32>
      %c0_78 = arith.constant 0 : index
      %c0_79 = arith.constant 0 : index
      %c0_80 = arith.constant 0 : index
      %c0_81 = arith.constant 0 : index
      %225 = vector.load %arg5[%c0_78, %c0_79, %c0_80, %c0_81] : memref<1x1x8x128xi32, #tpu.memory_space<vmem>>, vector<1x1x8x128xi32>
      %226 = vector.shape_cast %225 : vector<1x1x8x128xi32> to vector<8x128xi32>
      %227 = vector.shape_cast %224 : vector<8x128xi32> to vector<1x1x8x128xi32>
      tpu.vector_store %arg5[%c0_78, %c0_79, %c0_80, %c0_81], %227 {strides = array<i32>} : memref<1x1x8x128xi32, #tpu.memory_space<vmem>>, vector<1x1x8x128xi32>,
    } else {
    }
    return
  }
  func.func @transform_0(%arg0: i32, %arg1: i32, %arg2: i32) -> (i32, i32, i32, i32) {
    %c0_i32 = arith.constant 0 : i32
    %c0_i32_0 = arith.constant 0 : i32
    return %arg0, %arg1, %c0_i32, %arg2 : i32, i32, i32, i32
  }
  func.func @transform_1(%arg0: i32, %arg1: i32, %arg2: i32) -> (i32, i32, i32) {
    %c0_i32 = arith.constant 0 : i32
    %c0_i32_0 = arith.constant 0 : i32
    %c0_i32_1 = arith.constant 0 : i32
    return %arg0, %c0_i32, %c0_i32_0 : i32, i32, i32
  }
  func.func @transform_2(%arg0: i32, %arg1: i32, %arg2: i32) -> (i32, i32, i32, i32) {
    %c0_i32 = arith.constant 0 : i32
    %c0_i32_0 = arith.constant 0 : i32
    %c0_i32_1 = arith.constant 0 : i32
    return %arg0, %arg1, %c0_i32, %c0_i32_0 : i32, i32, i32, i32
  }
}

</mosaic_0001>

<llo_original>
// kernel: fwd.1
$region0: #{fwd.1}
  #allocation0 [shape = 'u32[]', space=smem, size = 0x4, offset = 0x4, fixed_abs, tag = 'smem constant byte address 0x4 - core index']
  #allocation1 [shape = 'u32[72,128]{1,0:T(1,128)}', space=vmem, size = 0x9000, scoped, tag = 'internal scratch']
  #allocation2 [shape = 'f32[8,4]{1,0:T(8,128)}', space=vmem, size = 0x1000, scoped, tag = 'scratch operand']
  #allocation3 [shape = 's32[8,4]{1,0:T(8,128)}', space=vmem, size = 0x1000, scoped, tag = 'scratch operand']
  %s0 = inlined_call_operand.vmem [shape: f32[2,2,4,256], index: 0, kind: input, shape index: {}]
  %s1 = inlined_call_operand.vmem [shape: f32[2,8,4], index: 1, kind: input, shape index: {}]
  %s2 = inlined_call_operand.hbm [shape: s32[2,2,8,128], index: 2, kind: output, shape index: {}]
  %s3 = sld [smem:[#allocation0]]
  $region49: #{fwd.1} parent=0
    _
  %s5 = ssub.s32 1, %s3
  %s6 = scalar_select 0, %s5, %s3
  $region1: #{fwd.1} parent=0
    #allocation4 [shape = 'u8[8192]{0}', space=vmem, size = 0x2000, scoped, tag = 'output window, operand 0']
    #allocation5 [shape = 's32[2]{0}', space=sflag, size = 0x8, scoped, tag = 'scoped memory for fwd.1']
    %7 = vsyncpa [#allocation5], 0
    %s8 = scalar_lea.sflag [#allocation5], 1
    %9 = vsyncpa %s8, 0
    loop: start=0, step=1, limit=6
    $region2: #{fwd.1} parent=1 // loop_pre_header
      _
    $region3: #{fwd.1} parent=1 // loop_header
      %s11 = sphi 0, %s15
      %p12 = scmp.ge.s32.totalorder %s11, 6
      %s18 = sphi 0, %s37
      %s19 = sphi 0, %s33
      %s20 = sphi 0, %s29
      %s21 = sphi 0, %s18
      %s22 = sphi 0, %s19
      %s23 = sphi 0, %s20
      %s24 = sphi 0, %s21
      %s25 = sphi 0, %s22
      %s26 = sphi 0, %s23
      %s44 = sphi 0, %s46
      %s47 = sphi 0, %s44
      %s48 = sphi 0, %s47
      %s64 = sphi 0, %s48
      %s70 = sphi 0, %s72
      %s73 = sphi 0, %s70
      %s74 = sphi 0, %s73
      %s90 = sphi 0, %s74
      %s98 = sphi 0, %s100
      %s101 = sphi 0, %s98
      %s102 = sphi 0, %s101
      %s118 = sphi 0, %s102
    $region4: #{fwd.1} parent=1 // loop_header_branch
      %14 = sbr.rel (%p12) target = $region8
    $region5: #{fwd.1} parent=1 // loop_body
      %s16 = ssub.s32 %s11, 1
      %s17 = ssub.s32 %s11, 2
      %s27 = sadd.s32 1, %s20
      %p28 = scmp.ge.s32.totalorder %s27, 1
      %s29 = scalar_select %p28, 0, %s27
      %s30 = sadd.s32 1, %s19
      %s31 = scalar_select %p28, %s30, %s19
      %p32 = scmp.ge.s32.totalorder %s31, 2
      %s33 = scalar_select %p32, 0, %s31
      %s34 = sadd.s32 1, %s18
      %s35 = scalar_select %p32, %s34, %s18
      %p36 = scmp.ge.s32.totalorder %s35, 2
      %s37 = scalar_select %p36, 0, %s35
      %s38 = ssub.s32 %s18, %s37
      %s39 = ssub.s32 %s19, %s33
      %s40 = sor.u32 %s38, %s39
      %s41 = ssub.s32 %s20, %s29
      %s42 = sor.u32 %s40, %s41
      %p43 = scmp.eq.s32.totalorder %s42, 0
      %s45 = sadd.s32 %s44, 1
      %s46 = scalar_select %p43, %s44, %s45
      %p49 = pneg %p43
      %p50 = scmp.eq.s32.totalorder %s11, 3
      %p51 = por %p49, %p50
      %p52 = scmp.ne.s32.totalorder %s44, %s47
      %p53 = scmp.eq.s32.totalorder %s11, 0
      %p54 = por %p52, %p53
      %p55 = scmp.ne.s32.totalorder %s44, %s47
      %p56 = scmp.eq.s32.totalorder %s16, 3
      %p57 = por %p55, %p56
      %p58 = scmp.ne.s32.totalorder %s47, %s48
      %p59 = scmp.eq.s32.totalorder %s16, 0
      %p60 = por %p58, %p59
      %p61 = scmp.ne.s32.totalorder %s47, %s48
      %p62 = scmp.eq.s32.totalorder %s17, 3
      %p63 = por %p61, %p62
      %p65 = scmp.ne.s32.totalorder %s48, %s64
      %p66 = scmp.eq.s32.totalorder %s17, 0
      %p67 = por %p65, %p66
      %s68 = ssub.s32 %s18, %s37
      %p69 = scmp.eq.s32.totalorder %s68, 0
      %s71 = sadd.s32 %s70, 1
      %s72 = scalar_select %p69, %s70, %s71
      %p75 = pneg %p69
      %p76 = scmp.eq.s32.totalorder %s11, 3
      %p77 = por %p75, %p76
      %p78 = scmp.ne.s32.totalorder %s70, %s73
      %p79 = scmp.eq.s32.totalorder %s11, 0
      %p80 = por %p78, %p79
      %p81 = scmp.ne.s32.totalorder %s70, %s73
      %p82 = scmp.eq.s32.totalorder %s16, 3
      %p83 = por %p81, %p82
      %p84 = scmp.ne.s32.totalorder %s73, %s74
      %p85 = scmp.eq.s32.totalorder %s16, 0
      %p86 = por %p84, %p85
      %p87 = scmp.ne.s32.totalorder %s73, %s74
      %p88 = scmp.eq.s32.totalorder %s17, 3
      %p89 = por %p87, %p88
      %p91 = scmp.ne.s32.totalorder %s74, %s90
      %p92 = scmp.eq.s32.totalorder %s17, 0
      %p93 = por %p91, %p92
      %s94 = ssub.s32 %s18, %s37
      %s95 = ssub.s32 %s19, %s33
      %s96 = sor.u32 %s94, %s95
      %p97 = scmp.eq.s32.totalorder %s96, 0
      %s99 = sadd.s32 %s98, 1
      %s100 = scalar_select %p97, %s98, %s99
      %p103 = pneg %p97
      %p104 = scmp.eq.s32.totalorder %s11, 3
      %p105 = por %p103, %p104
      %p106 = scmp.ne.s32.totalorder %s98, %s101
      %p107 = scmp.eq.s32.totalorder %s11, 0
      %p108 = por %p106, %p107
      %p109 = scmp.ne.s32.totalorder %s98, %s101
      %p110 = scmp.eq.s32.totalorder %s16, 3
      %p111 = por %p109, %p110
      %p112 = scmp.ne.s32.totalorder %s101, %s102
      %p113 = scmp.eq.s32.totalorder %s16, 0
      %p114 = por %p112, %p113
      %p115 = scmp.ne.s32.totalorder %s101, %s102
      %p116 = scmp.eq.s32.totalorder %s17, 3
      %p117 = por %p115, %p116
      %p119 = scmp.ne.s32.totalorder %s102, %s118
      %p120 = scmp.eq.s32.totalorder %s17, 0
      %p121 = por %p119, %p120
      %p122 = scmp.le.s32.totalorder 1, %s11
      %p123 = scmp.lt.s32.totalorder %s11, 5
      %p124 = pnand %p122, %p123
      %p125 = pneg %p124
      // Predicated region
      $region9: #{fwd.1} parent=5 // pred_check
        _
      $region10: #{fwd.1} parent=5 // pred_check_branch
        %127 = sbr.rel (%p124) target = $region12
      $region11: #{fwd.1} parent=5 // pred_region
        %s128 = ssub.s32 %s11, 1
      $region12: #{fwd.1} parent=5 // pred_fallthru
        _
      %p129 = scmp.lt.s32.totalorder %s11, 4
      // Predicated region
      $region13: #{fwd.1} parent=5 // pred_check
        %p130 = pneg %p129
      $region14: #{fwd.1} parent=5 // pred_check_branch
        %132 = sbr.rel (%p130) target = $region16
      $region15: #{fwd.1} parent=5 // pred_region
        // Predicated region
        $region17: #{fwd.1} parent=15 // pred_check
          %p133 = pneg %p54
        $region18: #{fwd.1} parent=15 // pred_check_branch
          %135 = sbr.rel (%p133) target = $region20
        $region19: #{fwd.1} parent=15 // pred_region
          %s136 = smul.u32 2, %s20
          %p137 = scmp.lt.s32.totalorder %s18, 1
          %s138 = scalar_select %p137, %s18, 1
          %p139 = scmp.lt.s32.totalorder %s19, 1
          %s140 = scalar_select %p139, %s19, 1
          %p141 = scmp.lt.s32.totalorder %s136, 1
          %s142 = scalar_select %p141, %s136, 1
          %s143 = smul.addr %s140, 2
          %s144 = sadd.s32 %s142, %s143
          %s145 = smul.addr %s138, 4
          %s146 = sadd.s32 %s144, %s145
          %s147 = smul.addr %s146, 4
          %s148 = scalar_lea.vmem %s0, %s147
          %s149 = smul.u32 2, %s20
        $region20: #{fwd.1} parent=15 // pred_fallthru
          _
        // Predicated region
        $region21: #{fwd.1} parent=15 // pred_check
          %p150 = pneg %p80
        $region22: #{fwd.1} parent=15 // pred_check_branch
          %152 = sbr.rel (%p150) target = $region24
        $region23: #{fwd.1} parent=15 // pred_region
          %p153 = scmp.lt.s32.totalorder %s18, 1
          %s154 = scalar_select %p153, %s18, 1
          %s155 = smul.addr %s154, 8
          %s156 = scalar_lea.vmem %s1, %s155
        $region24: #{fwd.1} parent=15 // pred_fallthru
          _
      $region16: #{fwd.1} parent=5 // pred_fallthru
        _
      %p157 = scmp.le.s32.totalorder 1, %s11
      %p158 = scmp.lt.s32.totalorder %s11, 5
      %p159 = pnand %p157, %p158
      %p160 = pneg %p159
      // Predicated region
      $region25: #{fwd.1} parent=5 // pred_check
        _
      $region26: #{fwd.1} parent=5 // pred_check_branch
        %162 = sbr.rel (%p159) target = $region28
      $region27: #{fwd.1} parent=5 // pred_region
        %s163 = ssub.s32 %s11, 1
        %s164 = smul.u32 2, %s23
        %p165 = scmp.lt.s32.totalorder %s21, 1
        %s166 = scalar_select %p165, %s21, 1
        %p167 = scmp.lt.s32.totalorder %s22, 1
        %s168 = scalar_select %p167, %s22, 1
        %p169 = scmp.lt.s32.totalorder %s164, 1
        %s170 = scalar_select %p169, %s164, 1
        %s171 = smul.addr %s168, 2
        %s172 = sadd.s32 %s170, %s171
        %s173 = smul.addr %s166, 4
        %s174 = sadd.s32 %s172, %s173
        %s175 = smul.addr %s174, 4
        %s176 = scalar_lea.vmem %s0, %s175
        %p177 = pneg %p60
        %p178 = pneg %p57
        %p179 = scmp.lt.s32.totalorder %s21, 1
        %s180 = scalar_select %p179, %s21, 1
        %s181 = smul.addr %s180, 8
        %s182 = scalar_lea.vmem %s1, %s181
        %p183 = pneg %p86
        %p184 = pneg %p83
        %p185 = pneg %p114
        %p186 = pneg %p111
        %s187 = sand.u32 %s101, 1
        %s188 = scalar_lea.sflag [#allocation5], %s187
        %s189 = sand.u32 %s101, 1
        %s190 = smul.addr %s189, 8
        %s191 = scalar_lea.vmem [#allocation4], %s190
        %s192 = smul.u32 2, %s23
        %p193 = scmp.lt.s32.totalorder %s21, 1
        %s194 = scalar_select %p193, %s21, 1
        %p195 = scmp.lt.s32.totalorder %s22, 1
        %s196 = scalar_select %p195, %s22, 1
        %p197 = scmp.lt.s32.totalorder %s192, 1
        %s198 = scalar_select %p197, %s192, 1
        %s199 = smul.addr %s196, 2
        %s200 = sadd.s32 %s198, %s199
        %s201 = smul.addr %s194, 4
        %s202 = sadd.s32 %s200, %s201
        %s203 = smul.addr %s202, 4
        %s204 = scalar_lea.vmem %s0, %s203
        %s205 = smul.u32 2, %s23
        %p206 = scmp.lt.s32.totalorder %s21, 1
        %s207 = scalar_select %p206, %s21, 1
        %s208 = smul.addr %s207, 8
        %s209 = scalar_lea.vmem %s1, %s208
        %p210 = scmp.eq.s32.totalorder %s23, 0
        // Predicated region
        $region29: #{fwd.1} parent=27 // pred_check
          %p211 = pneg %p210
        $region30: #{fwd.1} parent=27 // pred_check_branch
          %213 = sbr.rel (%p211) target = $region32
        $region31: #{fwd.1} parent=27 // pred_region
          %vm214 = vcmask 31744
          %215 = vst.msk [vmem:[#allocation2] sm:$0xff] %vm214, inf
          %216 = vst.msk [vmem:[#allocation3] sm:$0xff] %vm214, 4294967295
        $region32: #{fwd.1} parent=27 // pred_fallthru
          _
        %v217 = vld [vmem:[%s209] sm:$0xff]
        %219 = vrot.lane.b32.xlu0 %v217, 126
        %v220 = vpop.permute.xlu0 %219
        %v222 = vadd.f32 %v217, %v220
        %v223 = vmul.f32 %v222, 0.5
        %224 = vrot.lane.b32.xlu0 %v217, 2
        %v225 = vpop.permute.xlu0 %224
        %v227 = vsub.f32 %v217, %v225
        %v228 = vlaneseq
        %v229 = vand.u32 %v228, 127
        %v230 = vadd.s32 %v229, 128
        %v231 = vld [vmem:[#allocation2] sm:$0xff]
        %v232 = vld [vmem:[#allocation3] sm:$0xff]
        %s233 = smul.u32 %s23, 256
        %v234 = vld [vmem:[%s204] ss:$4 sm:$0x3]
        %s235 = scalar_lea.vmem %s204, 1
        %v236 = vld [vmem:[%s235] ss:$4 sm:$0x3]
        %s237 = scalar_lea.vmem %s204, 2
        %v238 = vld [vmem:[%s237] ss:$4 sm:$0x3]
        %s239 = scalar_lea.vmem %s204, 3
        %v240 = vld [vmem:[%s239] ss:$4 sm:$0x3]
        %v241 = vadd.f32 %v234, %v238
        %v242 = vmul.f32 %v241, 0.5
        %v243 = vadd.f32 %v236, %v240
        %v244 = vmul.f32 %v243, 0.5
        %v245 = vsub.f32 %v238, %v234
        %v246 = vsub.f32 %v240, %v236
        %v248 = vperm.slane %v242, 0
        %v249 = vperm.slane %v242, 1
        %253 = vset.pattern.permute.xlu0 0
        %254 = vperm.xlu0 %253, %v223
        %v255 = vpop.permute.xlu0 %254
        %v257 = vsub.f32 %v248, %v255
        %v258 = vsub.f32 %v249, %v255
        %v259 = vand.u32 2147483647, %v257
        %v260 = vand.u32 2147483647, %v258
        %v262 = vperm.slane %v244, 0
        %v263 = vperm.slane %v244, 1
        %266 = vset.pattern.permute.xlu0 1
        %267 = vperm.xlu0 %266, %v223
        %v268 = vpop.permute.xlu0 %267
        %v270 = vsub.f32 %v262, %v268
        %v271 = vsub.f32 %v263, %v268
        %v272 = vand.u32 2147483647, %v270
        %v273 = vand.u32 2147483647, %v271
        %v274 = vadd.f32 %v259, %v272
        %v275 = vadd.f32 %v260, %v273
        %v277 = vperm.slane %v245, 0
        %v278 = vperm.slane %v245, 1
        %282 = vset.pattern.permute.xlu0 2
        %283 = vperm.xlu0 %282, %v227
        %v284 = vpop.permute.xlu0 %283
        %v286 = vsub.f32 %v277, %v284
        %v287 = vsub.f32 %v278, %v284
        %v288 = vand.u32 2147483647, %v286
        %v289 = vand.u32 2147483647, %v287
        %v290 = vadd.f32 %v274, %v288
        %v291 = vadd.f32 %v275, %v289
        %v293 = vperm.slane %v246, 0
        %v294 = vperm.slane %v246, 1
        %297 = vset.pattern.permute.xlu0 3
        %298 = vperm.xlu0 %297, %v227
        %v299 = vpop.permute.xlu0 %298
        %v301 = vsub.f32 %v293, %v299
        %v302 = vsub.f32 %v294, %v299
        %v303 = vand.u32 2147483647, %v301
        %v304 = vand.u32 2147483647, %v302
        %v305 = vadd.f32 %v290, %v303
        %v306 = vadd.f32 %v291, %v304
        %v307 = vstv %s233
        %v308 = vadd.s32 %v229, %v307
        %v309 = vadd.s32 %v230, %v307
        %vm310 = vcmask 31744
        %v311 = vsel %vm310, %v231, inf
        %312 = vmin.xlane.f32.xlu0 %v311
        %v313 = vpop.xlane.xlu0 %312
        %v314 = vmin.f32 %v305, %v306
        %315 = vmin.xlane.f32.xlu0 %v314
        %v316 = vpop.xlane.xlu0 %315
        %v317 = vmin.f32 %v313, %v316
        %vm318 = vcmp.eq.f32.partialorder %v231, %v317
        %v319 = vsel %vm318, %v232, 1073741824
        %v320 = vsel %vm310, %v319, 2147483647
        %v321 = vand.u32 %v320, 65535
        %v322 = vshra.s32 %v320, 16
        %v323 = vcvt.s32.f32 %v321
        %v324 = vcvt.s32.f32 %v322
        %325 = vmin.xlane.f32.xlu0 %v324
        %v326 = vpop.xlane.xlu0 %325
        %vm327 = vcmp.eq.f32.partialorder %v324, %v326
        %v328 = vsel %vm327, %v323, inf
        %329 = vmin.xlane.f32.xlu0 %v328
        %v330 = vpop.xlane.xlu0 %329
        %v331 = vcvt.f32.s32 %v330
        %v332 = vcvt.f32.s32 %v326
        %v333 = vshll.u32 %v332, 16
        %v334 = vadd.s32 %v333, %v331
        %vm335 = vcmp.eq.f32.partialorder %v305, %v317
        %vm336 = vcmp.eq.f32.partialorder %v306, %v317
        %v337 = vsel %vm335, %v308, 1073741824
        %v338 = vsel %vm336, %v309, 1073741824
        %vm339 = vcmp.lt.s32.totalorder %v337, %v338
        %v340 = vsel %vm339, %v337, %v338
        %v341 = vand.u32 %v340, 65535
        %v342 = vshra.s32 %v340, 16
        %v343 = vcvt.s32.f32 %v341
        %v344 = vcvt.s32.f32 %v342
        %345 = vmin.xlane.f32.xlu0 %v344
        %v346 = vpop.xlane.xlu0 %345
        %vm347 = vcmp.eq.f32.partialorder %v344, %v346
        %v348 = vsel %vm347, %v343, inf
        %349 = vmin.xlane.f32.xlu0 %v348
        %v350 = vpop.xlane.xlu0 %349
        %v351 = vcvt.f32.s32 %v350
        %v352 = vcvt.f32.s32 %v346
        %v353 = vshll.u32 %v352, 16
        %v354 = vadd.s32 %v353, %v351
        %vm355 = vcmp.lt.s32.totalorder %v334, %v354
        %v356 = vsel %vm355, %v334, %v354
        %vm357 = vcmp.eq.s32.totalorder %v229, 0
        %v358 = vsel %vm357, %v317, %v231
        %v359 = vsel %vm357, %v356, %v232
        %vm360 = vcmp.eq.s32.totalorder %v232, %v356
        %v361 = vsel %vm360, inf, %v231
        %vm362 = vcmp.eq.s32.totalorder %v308, %v356
        %vm363 = vcmp.eq.s32.totalorder %v309, %v356
        %v364 = vsel %vm362, inf, %v305
        %v365 = vsel %vm363, inf, %v306
        %v366 = vsel %vm310, %v361, inf
        %367 = vmin.xlane.f32.xlu0 %v366
        %v368 = vpop.xlane.xlu0 %367
        %v369 = vmin.f32 %v364, %v365
        %370 = vmin.xlane.f32.xlu0 %v369
        %v371 = vpop.xlane.xlu0 %370
        %v372 = vmin.f32 %v368, %v371
        %vm373 = vcmp.eq.f32.partialorder %v361, %v372
        %v374 = vsel %vm373, %v232, 1073741824
        %v375 = vsel %vm310, %v374, 2147483647
        %v376 = vand.u32 %v375, 65535
        %v377 = vshra.s32 %v375, 16
        %v378 = vcvt.s32.f32 %v376
        %v379 = vcvt.s32.f32 %v377
        %380 = vmin.xlane.f32.xlu0 %v379
        %v381 = vpop.xlane.xlu0 %380
        %vm382 = vcmp.eq.f32.partialorder %v379, %v381
        %v383 = vsel %vm382, %v378, inf
        %384 = vmin.xlane.f32.xlu0 %v383
        %v385 = vpop.xlane.xlu0 %384
        %v386 = vcvt.f32.s32 %v385
        %v387 = vcvt.f32.s32 %v381
        %v388 = vshll.u32 %v387, 16
        %v389 = vadd.s32 %v388, %v386
        %vm390 = vcmp.eq.f32.partialorder %v364, %v372
        %vm391 = vcmp.eq.f32.partialorder %v365, %v372
        %v392 = vsel %vm390, %v308, 1073741824
        %v393 = vsel %vm391, %v309, 1073741824
        %vm394 = vcmp.lt.s32.totalorder %v392, %v393
        %v395 = vsel %vm394, %v392, %v393
        %v396 = vand.u32 %v395, 65535
        %v397 = vshra.s32 %v395, 16
        %v398 = vcvt.s32.f32 %v396
        %v399 = vcvt.s32.f32 %v397
        %400 = vmin.xlane.f32.xlu0 %v399
        %v401 = vpop.xlane.xlu0 %400
        %vm402 = vcmp.eq.f32.partialorder %v399, %v401
        %v403 = vsel %vm402, %v398, inf
        %404 = vmin.xlane.f32.xlu0 %v403
        %v405 = vpop.xlane.xlu0 %404
        %v406 = vcvt.f32.s32 %v405
        %v407 = vcvt.f32.s32 %v401
        %v408 = vshll.u32 %v407, 16
        %v409 = vadd.s32 %v408, %v406
        %vm410 = vcmp.lt.s32.totalorder %v389, %v409
        %v411 = vsel %vm410, %v389, %v409
        %vm412 = vcmp.eq.s32.totalorder %v229, 1
        %v413 = vsel %vm412, %v372, %v358
        %v414 = vsel %vm412, %v411, %v359
        %vm415 = vcmp.eq.s32.totalorder %v232, %v411
        %v416 = vsel %vm415, inf, %v361
        %vm417 = vcmp.eq.s32.totalorder %v308, %v411
        %vm418 = vcmp.eq.s32.totalorder %v309, %v411
        %v419 = vsel %vm417, inf, %v364
        %v420 = vsel %vm418, inf, %v365
        %v421 = vsel %vm310, %v416, inf
        %422 = vmin.xlane.f32.xlu0 %v421
        %v423 = vpop.xlane.xlu0 %422
        %v424 = vmin.f32 %v419, %v420
        %425 = vmin.xlane.f32.xlu0 %v424
        %v426 = vpop.xlane.xlu0 %425
        %v427 = vmin.f32 %v423, %v426
        %vm428 = vcmp.eq.f32.partialorder %v416, %v427
        %v429 = vsel %vm428, %v232, 1073741824
        %v430 = vsel %vm310, %v429, 2147483647
        %v431 = vand.u32 %v430, 65535
        %v432 = vshra.s32 %v430, 16
        %v433 = vcvt.s32.f32 %v431
        %v434 = vcvt.s32.f32 %v432
        %435 = vmin.xlane.f32.xlu0 %v434
        %v436 = vpop.xlane.xlu0 %435
        %vm437 = vcmp.eq.f32.partialorder %v434, %v436
        %v438 = vsel %vm437, %v433, inf
        %439 = vmin.xlane.f32.xlu0 %v438
        %v440 = vpop.xlane.xlu0 %439
        %v441 = vcvt.f32.s32 %v440
        %v442 = vcvt.f32.s32 %v436
        %v443 = vshll.u32 %v442, 16
        %v444 = vadd.s32 %v443, %v441
        %vm445 = vcmp.eq.f32.partialorder %v419, %v427
        %vm446 = vcmp.eq.f32.partialorder %v420, %v427
        %v447 = vsel %vm445, %v308, 1073741824
        %v448 = vsel %vm446, %v309, 1073741824
        %vm449 = vcmp.lt.s32.totalorder %v447, %v448
        %v450 = vsel %vm449, %v447, %v448
        %v451 = vand.u32 %v450, 65535
        %v452 = vshra.s32 %v450, 16
        %v453 = vcvt.s32.f32 %v451
        %v454 = vcvt.s32.f32 %v452
        %455 = vmin.xlane.f32.xlu0 %v454
        %v456 = vpop.xlane.xlu0 %455
        %vm457 = vcmp.eq.f32.partialorder %v454, %v456
        %v458 = vsel %vm457, %v453, inf
        %459 = vmin.xlane.f32.xlu0 %v458
        %v460 = vpop.xlane.xlu0 %459
        %v461 = vcvt.f32.s32 %v460
        %v462 = vcvt.f32.s32 %v456
        %v463 = vshll.u32 %v462, 16
        %v464 = vadd.s32 %v463, %v461
        %vm465 = vcmp.lt.s32.totalorder %v444, %v464
        %v466 = vsel %vm465, %v444, %v464
        %vm467 = vcmp.eq.s32.totalorder %v229, 2
        %v468 = vsel %vm467, %v427, %v413
        %v469 = vsel %vm467, %v466, %v414
        %vm470 = vcmp.eq.s32.totalorder %v232, %v466
        %v471 = vsel %vm470, inf, %v416
        %vm472 = vcmp.eq.s32.totalorder %v308, %v466
        %vm473 = vcmp.eq.s32.totalorder %v309, %v466
        %v474 = vsel %vm472, inf, %v419
        %v475 = vsel %vm473, inf, %v420
        %v476 = vsel %vm310, %v471, inf
        %477 = vmin.xlane.f32.xlu0 %v476
        %v478 = vpop.xlane.xlu0 %477
        %v479 = vmin.f32 %v474, %v475
        %480 = vmin.xlane.f32.xlu0 %v479
        %v481 = vpop.xlane.xlu0 %480
        %v482 = vmin.f32 %v478, %v481
        %vm483 = vcmp.eq.f32.partialorder %v471, %v482
        %v484 = vsel %vm483, %v232, 1073741824
        %v485 = vsel %vm310, %v484, 2147483647
        %v486 = vand.u32 %v485, 65535
        %v487 = vshra.s32 %v485, 16
        %v488 = vcvt.s32.f32 %v486
        %v489 = vcvt.s32.f32 %v487
        %490 = vmin.xlane.f32.xlu0 %v489
        %v491 = vpop.xlane.xlu0 %490
        %vm492 = vcmp.eq.f32.partialorder %v489, %v491
        %v493 = vsel %vm492, %v488, inf
        %494 = vmin.xlane.f32.xlu0 %v493
        %v495 = vpop.xlane.xlu0 %494
        %v496 = vcvt.f32.s32 %v495
        %v497 = vcvt.f32.s32 %v491
        %v498 = vshll.u32 %v497, 16
        %v499 = vadd.s32 %v498, %v496
        %vm500 = vcmp.eq.f32.partialorder %v474, %v482
        %vm501 = vcmp.eq.f32.partialorder %v475, %v482
        %v502 = vsel %vm500, %v308, 1073741824
        %v503 = vsel %vm501, %v309, 1073741824
        %vm504 = vcmp.lt.s32.totalorder %v502, %v503
        %v505 = vsel %vm504, %v502, %v503
        %v506 = vand.u32 %v505, 65535
        %v507 = vshra.s32 %v505, 16
        %v508 = vcvt.s32.f32 %v506
        %v509 = vcvt.s32.f32 %v507
        %510 = vmin.xlane.f32.xlu0 %v509
        %v511 = vpop.xlane.xlu0 %510
        %vm512 = vcmp.eq.f32.partialorder %v509, %v511
        %v513 = vsel %vm512, %v508, inf
        %514 = vmin.xlane.f32.xlu0 %v513
        %v515 = vpop.xlane.xlu0 %514
        %v516 = vcvt.f32.s32 %v515
        %v517 = vcvt.f32.s32 %v511
        %v518 = vshll.u32 %v517, 16
        %v519 = vadd.s32 %v518, %v516
        %vm520 = vcmp.lt.s32.totalorder %v499, %v519
        %v521 = vsel %vm520, %v499, %v519
        %vm522 = vcmp.eq.s32.totalorder %v229, 3
        %v523 = vsel %vm522, %v482, %v468
        %v524 = vsel %vm522, %v521, %v469
        %525 = vst.msk [vmem:[#allocation2] sm:$0xff] %vm310, %v523
        %526 = vst.msk [vmem:[#allocation3] sm:$0xff] %vm310, %v524
        // Predicated region
        $region33: #{fwd.1} parent=27 // pred_check
          %p527 = pneg %p210
        $region34: #{fwd.1} parent=27 // pred_check_branch
          %529 = sbr.rel (%p527) target = $region36
        $region35: #{fwd.1} parent=27 // pred_region
          %v530 = vsel %vm357, %v356, 0
          %v531 = vsel %vm412, %v411, %v530
          %v532 = vsel %vm467, %v466, %v531
          %v533 = vsel %vm522, %v521, %v532
          %534 = vst [vmem:[%s191] sm:$0xff] %v533
        $region36: #{fwd.1} parent=27 // pred_fallthru
          _
        %s535 = sand.u32 %s101, 1
        %s536 = scalar_lea.sflag [#allocation5], %s535
        %s537 = sand.u32 %s101, 1
        %s538 = smul.addr %s537, 8
        %s539 = scalar_lea.vmem [#allocation4], %s538
        // Predicated region
        $region37: #{fwd.1} parent=27 // pred_check
          %p540 = pneg %p111
        $region38: #{fwd.1} parent=27 // pred_check_branch
          %542 = sbr.rel (%p540) target = $region40
        $region39: #{fwd.1} parent=27 // pred_region
          %544 = vsyncadd %s536, 0
          %s545 = smul.addr %s21, 2
          %s546 = sadd.s32 %s22, %s545
          %s547 = smul.addr %s546, 8
          %s548 = scalar_lea.hbm %s2, %s547
          %s550 = sshll.u32 %s539, 4
          %s551 = int_to_ptr.vmem [resolvable:$true] %s550
          %s552 = sshll.u32 %s548, 4
          %s553 = int_to_ptr.hbm [resolvable:$true] %s552
          %555 = dma.vmem_to_hbm [thread:$0]  %s551, 128, %s553, %s536
        $region40: #{fwd.1} parent=27 // pred_fallthru
          _
      $region28: #{fwd.1} parent=5 // pred_fallthru
        _
      %p556 = scmp.le.s32.totalorder 2, %s11
      // Predicated region
      $region41: #{fwd.1} parent=5 // pred_check
        %p557 = pneg %p556
      $region42: #{fwd.1} parent=5 // pred_check_branch
        %559 = sbr.rel (%p557) target = $region44
      $region43: #{fwd.1} parent=5 // pred_region
        %s560 = ssub.s32 %s11, 2
        // Predicated region
        $region45: #{fwd.1} parent=43 // pred_check
          %p561 = pneg %p117
        $region46: #{fwd.1} parent=43 // pred_check_branch
          %563 = sbr.rel (%p561) target = $region48
        $region47: #{fwd.1} parent=43 // pred_region
          %s564 = sand.u32 %s102, 1
          %s565 = scalar_lea.sflag [#allocation5], %s564
          %s566 = sand.u32 %s102, 1
          %s567 = smul.addr %s566, 8
          %s568 = scalar_lea.vmem [#allocation4], %s567
          %570 = dma.done %s565, 128
        $region48: #{fwd.1} parent=43 // pred_fallthru
          _
      $region44: #{fwd.1} parent=5 // pred_fallthru
        _
    $region6: #{fwd.1} parent=1 // loop_footer
      %s15 = sadd.s32 1, %s11
    $region7: #{fwd.1} parent=1 // loop_footer_branch
      %10 = sbr.rel target = $region3
    $region8: #{fwd.1} parent=1 // loop_exit
      _
    %571 = vsyncpa [#allocation5], 1
    %s572 = scalar_lea.sflag [#allocation5], 1
    %573 = vsyncpa %s572, 1

</llo_original>
